<compile_context>
chip_gen: v5e
topology: v5e:2x2
jax: 0.10.0
libtpu: 0.0.40
codegen_flags: <defaults>
</compile_context>

<pallas_src>
import functools

import jax
import jax.numpy as jnp
from jax import lax
from jax.experimental import pallas as pl
from jax.experimental.pallas import tpu as pltpu


# --------------------------------------------------------------------------- #
# pass 1: SE squeeze (per-image pooled relu(bn(conv1x1(x))))
# --------------------------------------------------------------------------- #
def _se_pool_kernel(inv_hw, x_ref, sew_ref, sebnb_ref, pooled_ref):
    # se_bn scale is pre-folded into se_w; only shift + ReLU remain here.
    y = jnp.dot(x_ref[...], sew_ref[...], preferred_element_type=jnp.float32)   # (HW, C)
    y = jnp.maximum(y + sebnb_ref[...], 0.0)
    pooled_ref[...] = jnp.sum(y, axis=0, keepdims=True) * inv_hw                # (1, C)


# --------------------------------------------------------------------------- #
# pass 2: main pre-activation bottleneck (one image per grid step)
# --------------------------------------------------------------------------- #
def _main_kernel(H, W,
                 x_ref, pse_ref, bn1s_ref, bn1b_ref,
                 w1_ref, bn2b_ref, w2_ref, bn3b_ref, w3_ref, wsc_ref,
                 o_ref, pad_ref):
    HW = H * W
    P = w3_ref.shape[0]

    # relu(bn1(x)) in f32 (bn1 cannot be folded past its ReLU).
    o1 = jnp.maximum(x_ref[...].astype(jnp.float32) * bn1s_ref[...] + bn1b_ref[...], 0.0)
    o1b = o1.astype(jnp.bfloat16)

    # 1x1 shortcut projection and conv1 (bn2 scale pre-folded into w1).
    shortcut = jnp.dot(o1b, wsc_ref[...], preferred_element_type=jnp.float32)     # (HW, C)
    t1 = jnp.maximum(
        jnp.dot(o1b, w1_ref[...], preferred_element_type=jnp.float32) + bn2b_ref[...],
        0.0)                                                                      # (HW, P)

    # conv2: 3x3, stride 1, padding 1.  Per-image zero-padded scratch -> all 9 taps
    # read true zeros at the border, so no iota/masks are needed.  The scratch is tiny
    # ((H+2)*(W+2)*P bf16) so a full zero-fill per step is negligible; it is re-zeroed
    # every step because megacore-sharded grid steps may run on either TensorCore.
    pad_ref[...] = jnp.zeros(pad_ref.shape, pad_ref.dtype)
    pad_ref[1:H + 1, 1:W + 1, :] = t1.astype(jnp.bfloat16).reshape(H, W, P)

    acc = jnp.zeros((HW, P), jnp.float32)
    for dy in range(3):
        for dx in range(3):
            tap = pad_ref[dy:dy + H, dx:dx + W, :].reshape(HW, P)                 # bf16
            acc = acc + jnp.dot(tap, w2_ref[dy * 3 + dx],
                                preferred_element_type=jnp.float32)
    # bn3 scale is pre-folded into w2; only shift + ReLU remain.
    t2 = jnp.maximum(acc + bn3b_ref[...], 0.0)                                    # (HW, P)

    # conv3 (1x1), SE scaling (pse broadcasts over rows), residual add.
    t3 = jnp.dot(t2.astype(jnp.bfloat16), w3_ref[...], preferred_element_type=jnp.float32)
    o_ref[...] = t3 * pse_ref[...] + shortcut


# --------------------------------------------------------------------------- #
# wrapper
# --------------------------------------------------------------------------- #
def cpse_preact_bottleneck(x_nchw, params):
    """x_nchw: (B, Cin, H, W) float32 (PyTorch layout). Returns (B, 4*planes, H, W)."""
    B, Cin, H, W = x_nchw.shape
    P = params["w1"].shape[1]
    C = params["w3"].shape[1]
    HW = H * W
    bf = jnp.bfloat16

    # NCHW -> (B, HW, Cin) rows; activations stream to the kernels as bf16 (halves HBM
    # traffic); all matmul accumulation stays f32 via preferred_element_type.
    x_rows = jnp.transpose(x_nchw, (0, 2, 3, 1)).reshape(B, HW, Cin).astype(bf)

    # Fold inference-mode BN scales into the adjacent conv weights (one-time, wrapper side)
    # and cast all matmul weights to bf16.
    se_wf = (params["se_w"] * params["se_bn_s"]).astype(bf)                       # (Cin, C)
    w1f = (params["w1"] * params["bn2_s"]).astype(bf)                             # (Cin, P)
    w2f = (params["w2"] * params["bn3_s"].reshape(1, 1, P)).astype(bf)            # (9, P, P)
    w3b = params["w3"].astype(bf)                                                 # (P, C)
    wscb = params["wsc"].astype(bf)                                               # (Cin, C)

    cparams = pltpu.CompilerParams(
        dimension_semantics=("parallel",),          # v7x: shard images across both TCs
        vmem_limit_bytes=32 * 1024 * 1024)          # per-image blocks are far below this

    # ---- pass 1: SE squeeze -------------------------------------------------
    pooled = pl.pallas_call(
        functools.partial(_se_pool_kernel, 1.0 / HW),
        out_shape=jax.ShapeDtypeStruct((B, 1, C), jnp.float32),
        grid=(B,),
        in_specs=[pl.BlockSpec((None, HW, Cin), lambda b: (b, 0, 0)),   # x rows (per image)
                  pl.BlockSpec((Cin, C), lambda b: (0, 0)),             # se conv (scale folded)
                  pl.BlockSpec((1, C), lambda b: (0, 0))],              # se bn shift
        out_specs=pl.BlockSpec((None, 1, C), lambda b: (b, 0, 0)),
        compiler_params=cparams,
    )(x_rows, se_wf, params["se_bn_b"])

    # SE excitation: tiny (B, C) matmuls, plain-JAX glue.
    pse = jax.nn.sigmoid(
        jnp.maximum(pooled[:, 0, :] @ params["fc1"], 0.0) @ params["fc2"])        # (B, C)
    pse = pse.reshape(B, 1, C)

    # ---- pass 2: main bottleneck -------------------------------------------
    out_rows = pl.pallas_call(
        functools.partial(_main_kernel, H, W),
        out_shape=jax.ShapeDtypeStruct((B, HW, C), jnp.float32),
        grid=(B,),
        in_specs=[pl.BlockSpec((None, HW, Cin), lambda b: (b, 0, 0)),   # x rows (per image)
                  pl.BlockSpec((None, 1, C), lambda b: (b, 0, 0)),      # pse (per image)
                  pl.BlockSpec((1, Cin), lambda b: (0, 0)),             # bn1 scale
                  pl.BlockSpec((1, Cin), lambda b: (0, 0)),             # bn1 shift
                  pl.BlockSpec((Cin, P), lambda b: (0, 0)),             # w1 (bn2 scale folded)
                  pl.BlockSpec((1, P), lambda b: (0, 0)),               # bn2 shift
                  pl.BlockSpec((9, P, P), lambda b: (0, 0, 0)),         # w2 taps (bn3 scale folded)
                  pl.BlockSpec((1, P), lambda b: (0, 0)),               # bn3 shift
                  pl.BlockSpec((P, C), lambda b: (0, 0)),               # w3
                  pl.BlockSpec((Cin, C), lambda b: (0, 0))],            # shortcut 1x1
        out_specs=pl.BlockSpec((None, HW, C), lambda b: (b, 0, 0)),
        scratch_shapes=[pltpu.VMEM((H + 2, W + 2, P), jnp.bfloat16)],   # zero-padded halo buffer
        compiler_params=cparams,
    )(x_rows, pse, params["bn1_s"], params["bn1_b"],
      w1f, params["bn2_b"], w2f, params["bn3_b"], w3b, wscb)

    return jnp.transpose(out_rows.reshape(B, H, W, C), (0, 3, 1, 2))


# --------------------------------------------------------------------------- #
# deterministic synthetic parameters (shapes from the module __init__)
# --------------------------------------------------------------------------- #
def init_params(key, in_planes, planes, expansion=4, reduction=16, eps=1e-5):
    C = expansion * planes
    hid = C // reduction
    ks = jax.random.split(key, 12)

    def w(k, shape, scale=0.2):
        return scale * jax.random.normal(k, shape, jnp.float32)

    def bn(k, ch):
        k1, k2, k3, k4 = jax.random.split(k, 4)
        gamma = 1.0 + 0.1 * jax.random.normal(k1, (ch,), jnp.float32)
        beta = 0.1 * jax.random.normal(k2, (ch,), jnp.float32)
        mean = 0.1 * jax.random.normal(k3, (ch,), jnp.float32)
        var = 1.0 + 0.1 * jax.random.uniform(k4, (ch,), jnp.float32)
        scale = gamma / jnp.sqrt(var + eps)
        shift = beta - mean * scale
        return scale.reshape(1, ch), shift.reshape(1, ch)

    bn1_s, bn1_b = bn(ks[0], in_planes)
    bn2_s, bn2_b = bn(ks[1], planes)
    bn3_s, bn3_b = bn(ks[2], planes)
    se_bn_s, se_bn_b = bn(ks[3], C)
    return dict(
        bn1_s=bn1_s, bn1_b=bn1_b,
        w1=w(ks[4], (in_planes, planes)),          # conv1 1x1 (Cin -> planes)
        bn2_s=bn2_s, bn2_b=bn2_b,
        w2=w(ks[5], (9, planes, planes)),          # conv2 3x3, tap-major (ky*3+kx, Cin, Cout)
        bn3_s=bn3_s, bn3_b=bn3_b,
        w3=w(ks[6], (planes, C)),                  # conv3 1x1 (planes -> 4*planes)
        se_w=w(ks[7], (in_planes, C)),             # CPSE conv 1x1
        se_bn_s=se_bn_s, se_bn_b=se_bn_b,
        fc1=w(ks[8], (C, hid)),                    # CPSE fc1 (no bias)
        fc2=w(ks[9], (hid, C)),                    # CPSE fc2 (no bias)
        wsc=w(ks[10], (in_planes, C)),             # shortcut 1x1 conv
    )


# plain-JAX full-f32 reference (same math, lax.conv for the 3x3)
def reference(x_nchw, p):
    B, Cin, H, W = x_nchw.shape
    P = p["w1"].shape[1]
    C = p["w3"].shape[1]
    xf = jnp.transpose(x_nchw, (0, 2, 3, 1)).reshape(B * H * W, Cin)

    y = jnp.maximum((xf @ p["se_w"]) * p["se_bn_s"] + p["se_bn_b"], 0.0)
    pooled = jnp.mean(y.reshape(B, H * W, C), axis=1)
    pse = jax.nn.sigmoid(jnp.maximum(pooled @ p["fc1"], 0.0) @ p["fc2"])

    o1 = jnp.maximum(xf * p["bn1_s"] + p["bn1_b"], 0.0)
    shortcut = o1 @ p["wsc"]
    t = jnp.maximum((o1 @ p["w1"]) * p["bn2_s"] + p["bn2_b"], 0.0)
    t4 = lax.conv_general_dilated(t.reshape(B, H, W, P), p["w2"].reshape(3, 3, P, P),
                                  (1, 1), ((1, 1), (1, 1)),
                                  dimension_numbers=("NHWC", "HWIO", "NHWC"))
    t = t4.reshape(B * H * W, P)
    t = jnp.maximum(t * p["bn3_s"] + p["bn3_b"], 0.0)
    t = t @ p["w3"]
    out = t.reshape(B, H * W, C) * pse[:, None, :] + shortcut.reshape(B, H * W, C)
    return jnp.transpose(out.reshape(B, H, W, C), (0, 3, 1, 2))


if __name__ == "__main__":
    key = jax.random.PRNGKey(0)
    kx, kp = jax.random.split(key)

    B, H, W = 2, 16, 16
    in_planes, planes = 16, 8                  # expansion*planes = 32 != in_planes -> projections active
    x = jax.random.normal(kx, (B, in_planes, H, W), jnp.float32)   # NCHW, as in PyTorch
    params = init_params(kp, in_planes, planes)

    out = cpse_preact_bottleneck(x, params)
    out = jax.block_until_ready(out)

    ref = reference(x, params)
    assert out.shape == (B, 4 * planes, H, W), out.shape
    # bf16 matmul operands (f32 accumulation) vs full-f32 reference -> loose tolerance.
    max_err = float(jnp.max(jnp.abs(out - ref)))
    assert jnp.allclose(out, ref, atol=5e-2, rtol=5e-2), max_err
    print("KERNEL_OK")
</pallas_src>

<mosaic_0001>
module attributes {stable_mosaic.version = 11 : i64} {
  func.func @_se_pool_kernel(%arg0: i32, %arg1: memref<1x256x16xbf16, #tpu.memory_space<vmem>>, %arg2: memref<16x32xbf16, #tpu.memory_space<vmem>>, %arg3: memref<1x32xf32, #tpu.memory_space<vmem>>, %arg4: memref<1x1x32xf32, #tpu.memory_space<vmem>>) attributes {dimension_semantics = [#tpu.dimension_semantics<parallel>], iteration_bounds = array<i64: 2>, scalar_prefetch = 0 : i64, scratch_operands = 0 : i64, tpu.core_type = #tpu.core_type<tc>, window_params = [{transform_indices = @transform_0, window_bounds = array<i64: 1, 256, 16>}, {pipeline_mode = #tpu.pipeline_mode<synchronous>, transform_indices = @transform_1, window_bounds = array<i64: 16, 32>}, {pipeline_mode = #tpu.pipeline_mode<synchronous>, transform_indices = @transform_2, window_bounds = array<i64: 1, 32>}, {transform_indices = @transform_3, window_bounds = array<i64: 1, 1, 32>}]} {
    %c0 = arith.constant 0 : index
    %c0_0 = arith.constant 0 : index
    %c0_1 = arith.constant 0 : index
    %0 = vector.load %arg1[%c0, %c0_0, %c0_1] : memref<1x256x16xbf16, #tpu.memory_space<vmem>>, vector<1x256x16xbf16>
    %1 = vector.shape_cast %0 : vector<1x256x16xbf16> to vector<256x16xbf16>
    %c0_2 = arith.constant 0 : index
    %c0_3 = arith.constant 0 : index
    %2 = vector.load %arg2[%c0_2, %c0_3] : memref<16x32xbf16, #tpu.memory_space<vmem>>, vector<16x32xbf16>
    %cst = arith.constant dense<0.000000e+00> : vector<256x32xf32>
    %3 = tpu.matmul %1, %2, %cst {dimension_numbers = #tpu.dot_dimension_numbers<[1], [0], [0], [1], [0, 0, 1, 1], [], []>} : vector<256x16xbf16>, vector<16x32xbf16>, vector<256x32xf32> -> vector<256x32xf32>
    %c0_4 = arith.constant 0 : index
    %c0_5 = arith.constant 0 : index
    %4 = vector.load %arg3[%c0_4, %c0_5] : memref<1x32xf32, #tpu.memory_space<vmem>>, vector<1x32xf32>
    %5 = vector.broadcast %4 : vector<1x32xf32> to vector<256x32xf32>
    %6 = arith.addf %3, %5 : vector<256x32xf32>
    %cst_6 = arith.constant 0.000000e+00 : f32
    %7 = vector.broadcast %cst_6 : f32 to vector<256x32xf32>
    %8 = arith.maximumf %6, %7 : vector<256x32xf32>
    %cst_7 = arith.constant dense<0.000000e+00> : vector<32xf32>
    %9 = vector.multi_reduction <add>, %8, %cst_7 [0] : vector<256x32xf32> to vector<32xf32>
    %10 = vector.shape_cast %9 : vector<32xf32> to vector<1x32xf32>
    %cst_8 = arith.constant 3.906250e-03 : f32
    %11 = vector.broadcast %cst_8 : f32 to vector<1x32xf32>
    %12 = arith.mulf %10, %11 : vector<1x32xf32>
    %c0_9 = arith.constant 0 : index
    %c0_10 = arith.constant 0 : index
    %c0_11 = arith.constant 0 : index
    %13 = vector.load %arg4[%c0_9, %c0_10, %c0_11] : memref<1x1x32xf32, #tpu.memory_space<vmem>>, vector<1x1x32xf32>
    %14 = vector.shape_cast %13 : vector<1x1x32xf32> to vector<1x32xf32>
    %15 = vector.shape_cast %12 : vector<1x32xf32> to vector<1x1x32xf32>
    tpu.vector_store %arg4[%c0_9, %c0_10, %c0_11], %15 {strides = array<i32>} : memref<1x1x32xf32, #tpu.memory_space<vmem>>, vector<1x1x32xf32>,
    return
  }
  func.func @transform_0(%arg0: i32) -> (i32, i32, i32) {
    %c0_i32 = arith.constant 0 : i32
    %c0_i32_0 = arith.constant 0 : i32
    %c0_i32_1 = arith.constant 0 : i32
    return %arg0, %c0_i32, %c0_i32_0 : i32, i32, i32
  }
  func.func @transform_1(%arg0: i32) -> (i32, i32) {
    %c0_i32 = arith.constant 0 : i32
    %c0_i32_0 = arith.constant 0 : i32
    %c0_i32_1 = arith.constant 0 : i32
    return %c0_i32, %c0_i32_0 : i32, i32
  }
  func.func @transform_2(%arg0: i32) -> (i32, i32) {
    %c0_i32 = arith.constant 0 : i32
    %c0_i32_0 = arith.constant 0 : i32
    %c0_i32_1 = arith.constant 0 : i32
    return %c0_i32, %c0_i32_0 : i32, i32
  }
  func.func @transform_3(%arg0: i32) -> (i32, i32, i32) {
    %c0_i32 = arith.constant 0 : i32
    %c0_i32_0 = arith.constant 0 : i32
    %c0_i32_1 = arith.constant 0 : i32
    return %arg0, %c0_i32, %c0_i32_0 : i32, i32, i32
  }
}

</mosaic_0001>

<llo_original>
// kernel: tpu_custom_call.1
$region0: #{tpu_custom_call.1}
  #allocation0 [shape = 'u32[]', space=smem, size = 0x4, offset = 0x4, fixed_abs, tag = 'smem constant byte address 0x4 - core index']
  #allocation1 [shape = 'u32[72,128]{1,0:T(1,128)}', space=vmem, size = 0x9000, scoped, tag = 'internal scratch']
  %s0 = inlined_call_operand.vmem [shape: bf16[2,256,16], index: 0, kind: input, shape index: {}]
  %s1 = inlined_call_operand.vmem [shape: bf16[16,32], index: 1, kind: input, shape index: {}]
  %s2 = inlined_call_operand.vmem [shape: f32[1,32], index: 2, kind: input, shape index: {}]
  %s3 = inlined_call_operand.hbm [shape: f32[2,1,32], index: 3, kind: output, shape index: {}]
  %s4 = sld [smem:[#allocation0]]
  $region45: #{tpu_custom_call.1} parent=0
    _
  %s6 = ssub.s32 1, %s4
  %s7 = scalar_select 0, %s6, %s4
  $region1: #{tpu_custom_call.1} parent=0
    #allocation2 [shape = 'u8[1024]{0}', space=vmem, size = 0x400, scoped, tag = 'output window, operand 0']
    #allocation3 [shape = 's32[2]{0}', space=sflag, size = 0x8, scoped, tag = 'scoped memory for tpu_custom_call.1']
    %8 = vsyncpa [#allocation3], 0
    %s9 = scalar_lea.sflag [#allocation3], 1
    %10 = vsyncpa %s9, 0
    loop: start=0, step=1, limit=4
    $region2: #{tpu_custom_call.1} parent=1 // loop_pre_header
      _
    $region3: #{tpu_custom_call.1} parent=1 // loop_header
      %s12 = sphi 0, %s16
      %p13 = scmp.ge.s32.totalorder %s12, 4
      %s22 = sphi 0, %s24
      %s25 = sphi 0, %s22
      %s26 = sphi 0, %s25
      %s42 = sphi 0, %s26
      %s46 = sphi 0, %s46
      %s48 = sphi 0, %s46
      %s49 = sphi 0, %s48
      %s63 = sphi 0, %s49
      %s67 = sphi 0, %s67
      %s69 = sphi 0, %s67
      %s70 = sphi 0, %s69
      %s84 = sphi 0, %s70
      %s90 = sphi 0, %s92
      %s93 = sphi 0, %s90
      %s94 = sphi 0, %s93
      %s110 = sphi 0, %s94
    $region4: #{tpu_custom_call.1} parent=1 // loop_header_branch
      %15 = sbr.rel (%p13) target = $region8
    $region5: #{tpu_custom_call.1} parent=1 // loop_body
      %s17 = ssub.s32 %s12, 1
      %s18 = ssub.s32 %s12, 2
      %s19 = sadd.s32 %s12, 1
      %s20 = ssub.s32 %s12, %s19
      %p21 = scmp.eq.s32.totalorder %s20, 0
      %s23 = sadd.s32 %s22, 1
      %s24 = scalar_select %p21, %s22, %s23
      %p27 = pneg %p21
      %p28 = scmp.eq.s32.totalorder %s12, 1
      %p29 = por %p27, %p28
      %p30 = scmp.ne.s32.totalorder %s22, %s25
      %p31 = scmp.eq.s32.totalorder %s12, 0
      %p32 = por %p30, %p31
      %p33 = scmp.ne.s32.totalorder %s22, %s25
      %p34 = scmp.eq.s32.totalorder %s17, 1
      %p35 = por %p33, %p34
      %p36 = scmp.ne.s32.totalorder %s25, %s26
      %p37 = scmp.eq.s32.totalorder %s17, 0
      %p38 = por %p36, %p37
      %p39 = scmp.ne.s32.totalorder %s25, %s26
      %p40 = scmp.eq.s32.totalorder %s18, 1
      %p41 = por %p39, %p40
      %p43 = scmp.ne.s32.totalorder %s26, %s42
      %p44 = scmp.eq.s32.totalorder %s18, 0
      %p45 = por %p43, %p44
      %s47 = sadd.s32 %s46, 1
      %p50 = scmp.eq.s32.totalorder %s12, 1
      %p51 = scmp.ne.s32.totalorder %s46, %s48
      %p52 = scmp.eq.s32.totalorder %s12, 0
      %p53 = por %p51, %p52
      %p54 = scmp.ne.s32.totalorder %s46, %s48
      %p55 = scmp.eq.s32.totalorder %s17, 1
      %p56 = por %p54, %p55
      %p57 = scmp.ne.s32.totalorder %s48, %s49
      %p58 = scmp.eq.s32.totalorder %s17, 0
      %p59 = por %p57, %p58
      %p60 = scmp.ne.s32.totalorder %s48, %s49
      %p61 = scmp.eq.s32.totalorder %s18, 1
      %p62 = por %p60, %p61
      %p64 = scmp.ne.s32.totalorder %s49, %s63
      %p65 = scmp.eq.s32.totalorder %s18, 0
      %p66 = por %p64, %p65
      %s68 = sadd.s32 %s67, 1
      %p71 = scmp.eq.s32.totalorder %s12, 1
      %p72 = scmp.ne.s32.totalorder %s67, %s69
      %p73 = scmp.eq.s32.totalorder %s12, 0
      %p74 = por %p72, %p73
      %p75 = scmp.ne.s32.totalorder %s67, %s69
      %p76 = scmp.eq.s32.totalorder %s17, 1
      %p77 = por %p75, %p76
      %p78 = scmp.ne.s32.totalorder %s69, %s70
      %p79 = scmp.eq.s32.totalorder %s17, 0
      %p80 = por %p78, %p79
      %p81 = scmp.ne.s32.totalorder %s69, %s70
      %p82 = scmp.eq.s32.totalorder %s18, 1
      %p83 = por %p81, %p82
      %p85 = scmp.ne.s32.totalorder %s70, %s84
      %p86 = scmp.eq.s32.totalorder %s18, 0
      %p87 = por %p85, %p86
      %s88 = ssub.s32 %s12, %s19
      %p89 = scmp.eq.s32.totalorder %s88, 0
      %s91 = sadd.s32 %s90, 1
      %s92 = scalar_select %p89, %s90, %s91
      %p95 = pneg %p89
      %p96 = scmp.eq.s32.totalorder %s12, 1
      %p97 = por %p95, %p96
      %p98 = scmp.ne.s32.totalorder %s90, %s93
      %p99 = scmp.eq.s32.totalorder %s12, 0
      %p100 = por %p98, %p99
      %p101 = scmp.ne.s32.totalorder %s90, %s93
      %p102 = scmp.eq.s32.totalorder %s17, 1
      %p103 = por %p101, %p102
      %p104 = scmp.ne.s32.totalorder %s93, %s94
      %p105 = scmp.eq.s32.totalorder %s17, 0
      %p106 = por %p104, %p105
      %p107 = scmp.ne.s32.totalorder %s93, %s94
      %p108 = scmp.eq.s32.totalorder %s18, 1
      %p109 = por %p107, %p108
      %p111 = scmp.ne.s32.totalorder %s94, %s110
      %p112 = scmp.eq.s32.totalorder %s18, 0
      %p113 = por %p111, %p112
      %p114 = scmp.le.s32.totalorder 1, %s12
      %p115 = scmp.lt.s32.totalorder %s12, 3
      %p116 = pnand %p114, %p115
      %p117 = pneg %p116
      // Predicated region
      $region9: #{tpu_custom_call.1} parent=5 // pred_check
        _
      $region10: #{tpu_custom_call.1} parent=5 // pred_check_branch
        %119 = sbr.rel (%p116) target = $region12
      $region11: #{tpu_custom_call.1} parent=5 // pred_region
        %s120 = ssub.s32 %s12, 1
        // Predicated region
        $region13: #{tpu_custom_call.1} parent=11 // pred_check
          %p121 = pneg %p59
        $region14: #{tpu_custom_call.1} parent=11 // pred_check_branch
          %123 = sbr.rel (%p121) target = $region16
        $region15: #{tpu_custom_call.1} parent=11 // pred_region
          _
        $region16: #{tpu_custom_call.1} parent=11 // pred_fallthru
          _
        // Predicated region
        $region17: #{tpu_custom_call.1} parent=11 // pred_check
          %p124 = pneg %p80
        $region18: #{tpu_custom_call.1} parent=11 // pred_check_branch
          %126 = sbr.rel (%p124) target = $region20
        $region19: #{tpu_custom_call.1} parent=11 // pred_region
          _
        $region20: #{tpu_custom_call.1} parent=11 // pred_fallthru
          _
      $region12: #{tpu_custom_call.1} parent=5 // pred_fallthru
        _
      %p127 = scmp.lt.s32.totalorder %s12, 2
      // Predicated region
      $region21: #{tpu_custom_call.1} parent=5 // pred_check
        %p128 = pneg %p127
      $region22: #{tpu_custom_call.1} parent=5 // pred_check_branch
        %130 = sbr.rel (%p128) target = $region24
      $region23: #{tpu_custom_call.1} parent=5 // pred_region
        // Predicated region
        $region25: #{tpu_custom_call.1} parent=23 // pred_check
          %p131 = pneg %p32
        $region26: #{tpu_custom_call.1} parent=23 // pred_check_branch
          %133 = sbr.rel (%p131) target = $region28
        $region27: #{tpu_custom_call.1} parent=23 // pred_region
          %p134 = scmp.lt.s32.totalorder %s12, 1
          %s135 = scalar_select %p134, %s12, 1
          %s136 = smul.addr %s135, 32
          %s137 = smul.addr %s136, 4
          %s138 = scalar_lea.vmem %s0, %s137
        $region28: #{tpu_custom_call.1} parent=23 // pred_fallthru
          _
      $region24: #{tpu_custom_call.1} parent=5 // pred_fallthru
        _
      %p139 = scmp.le.s32.totalorder 1, %s12
      %p140 = scmp.lt.s32.totalorder %s12, 3
      %p141 = pnand %p139, %p140
      %p142 = pneg %p141
      // Predicated region
      $region29: #{tpu_custom_call.1} parent=5 // pred_check
        _
      $region30: #{tpu_custom_call.1} parent=5 // pred_check_branch
        %144 = sbr.rel (%p141) target = $region32
      $region31: #{tpu_custom_call.1} parent=5 // pred_region
        %s145 = ssub.s32 %s12, 1
        %p146 = scmp.lt.s32.totalorder %s17, 1
        %s147 = scalar_select %p146, %s17, 1
        %s148 = smul.addr %s147, 32
        %s149 = smul.addr %s148, 4
        %s150 = scalar_lea.vmem %s0, %s149
        %p151 = pneg %p38
        %p152 = pneg %p35
        %p153 = pneg %p59
        %p154 = pneg %p56
        %p155 = pneg %p80
        %p156 = pneg %p77
        %p157 = pneg %p106
        %p158 = pneg %p103
        %s159 = sand.u32 %s93, 1
        %s160 = scalar_lea.sflag [#allocation3], %s159
        %s161 = sand.u32 %s93, 1
        %s162 = scalar_lea.vmem [#allocation2], %s161
        %p163 = scmp.lt.s32.totalorder %s17, 1
        %s164 = scalar_select %p163, %s17, 1
        %s165 = smul.addr %s164, 32
        %s166 = smul.addr %s165, 4
        %s167 = scalar_lea.vmem %s0, %s166
        %v169 = vld [vmem:[%s167] sm:$0xf]
        %v170 = vld [vmem:[%s167 + $0x4] sm:$0xf]
        %v171 = vld [vmem:[%s167 + $0x8] sm:$0xf]
        %v172 = vld [vmem:[%s167 + $0xc] sm:$0xf]
        %v173 = vld [vmem:[%s167 + $0x10] sm:$0xf]
        %v174 = vld [vmem:[%s167 + $0x14] sm:$0xf]
        %v175 = vld [vmem:[%s167 + $0x18] sm:$0xf]
        %v176 = vld [vmem:[%s167 + $0x1c] sm:$0xf]
        %v177 = vld [vmem:[%s167 + $0x20] sm:$0xf]
        %v178 = vld [vmem:[%s167 + $0x24] sm:$0xf]
        %v179 = vld [vmem:[%s167 + $0x28] sm:$0xf]
        %v180 = vld [vmem:[%s167 + $0x2c] sm:$0xf]
        %v181 = vld [vmem:[%s167 + $0x30] sm:$0xf]
        %v182 = vld [vmem:[%s167 + $0x34] sm:$0xf]
        %v183 = vld [vmem:[%s167 + $0x38] sm:$0xf]
        %v184 = vld [vmem:[%s167 + $0x3c] sm:$0xf]
        %v185 = vld [vmem:[%s167 + $0x40] sm:$0xf]
        %v186 = vld [vmem:[%s167 + $0x44] sm:$0xf]
        %v187 = vld [vmem:[%s167 + $0x48] sm:$0xf]
        %v188 = vld [vmem:[%s167 + $0x4c] sm:$0xf]
        %v189 = vld [vmem:[%s167 + $0x50] sm:$0xf]
        %v190 = vld [vmem:[%s167 + $0x54] sm:$0xf]
        %v191 = vld [vmem:[%s167 + $0x58] sm:$0xf]
        %v192 = vld [vmem:[%s167 + $0x5c] sm:$0xf]
        %v193 = vld [vmem:[%s167 + $0x60] sm:$0xf]
        %v194 = vld [vmem:[%s167 + $0x64] sm:$0xf]
        %v195 = vld [vmem:[%s167 + $0x68] sm:$0xf]
        %v196 = vld [vmem:[%s167 + $0x6c] sm:$0xf]
        %v197 = vld [vmem:[%s167 + $0x70] sm:$0xf]
        %v198 = vld [vmem:[%s167 + $0x74] sm:$0xf]
        %v199 = vld [vmem:[%s167 + $0x78] sm:$0xf]
        %v200 = vld [vmem:[%s167 + $0x7c] sm:$0xf]
        %v201 = vld [vmem:[%s1] sm:$0xf]
        %v202 = vld [vmem:[%s1 + $0x4] sm:$0xf]
        %v203 = vld [vmem:[%s2] sm:$0x1]
        %v205 = vperm.slane %v203, 0
        %v239 = vunpack.c.l.b16 %v169
        %v240 = vunpack.c.l.b16 %v170
        %v241 = vunpack.c.l.b16 %v171
        %v242 = vunpack.c.l.b16 %v172
        %v243 = vunpack.c.l.b16 %v173
        %v244 = vunpack.c.l.b16 %v174
        %v245 = vunpack.c.l.b16 %v175
        %v246 = vunpack.c.l.b16 %v176
        %v247 = vunpack.c.l.b16 %v177
        %v248 = vunpack.c.l.b16 %v178
        %v249 = vunpack.c.l.b16 %v179
        %v250 = vunpack.c.l.b16 %v180
        %v251 = vunpack.c.l.b16 %v181
        %v252 = vunpack.c.l.b16 %v182
        %v253 = vunpack.c.l.b16 %v183
        %v254 = vunpack.c.l.b16 %v184
        %v255 = vunpack.c.l.b16 %v185
        %v256 = vunpack.c.l.b16 %v186
        %v257 = vunpack.c.l.b16 %v187
        %v258 = vunpack.c.l.b16 %v188
        %v259 = vunpack.c.l.b16 %v189
        %v260 = vunpack.c.l.b16 %v190
        %v261 = vunpack.c.l.b16 %v191
        %v262 = vunpack.c.l.b16 %v192
        %v263 = vunpack.c.l.b16 %v193
        %v264 = vunpack.c.l.b16 %v194
        %v265 = vunpack.c.l.b16 %v195
        %v266 = vunpack.c.l.b16 %v196
        %v267 = vunpack.c.l.b16 %v197
        %v268 = vunpack.c.l.b16 %v198
        %v269 = vunpack.c.l.b16 %v199
        %v270 = vunpack.c.l.b16 %v200
        %v271 = vpack.c.b16 %v240, %v239
        %v272 = vpack.c.b16 %v242, %v241
        %v273 = vpack.c.b16 %v244, %v243
        %v274 = vpack.c.b16 %v246, %v245
        %v275 = vpack.c.b16 %v248, %v247
        %v276 = vpack.c.b16 %v250, %v249
        %v277 = vpack.c.b16 %v252, %v251
        %v278 = vpack.c.b16 %v254, %v253
        %v279 = vpack.c.b16 %v256, %v255
        %v280 = vpack.c.b16 %v258, %v257
        %v281 = vpack.c.b16 %v260, %v259
        %v282 = vpack.c.b16 %v262, %v261
        %v283 = vpack.c.b16 %v264, %v263
        %v284 = vpack.c.b16 %v266, %v265
        %v285 = vpack.c.b16 %v268, %v267
        %v286 = vpack.c.b16 %v270, %v269
        %v289 = vunpack.c.l.b16 %v201
        %v290 = vunpack.c.l.b16 %v202
        %v291 = vpack.c.b16 %v290, %v289
        %vm293 = vcmask 130048
        %v295 = vsel %vm293, %v271, 0
        %v298 = vsel %vm293, %v272, 0
        %v301 = vsel %vm293, %v273, 0
        %v304 = vsel %vm293, %v274, 0
        %v307 = vsel %vm293, %v275, 0
        %v310 = vsel %vm293, %v276, 0
        %v313 = vsel %vm293, %v277, 0
        %v316 = vsel %vm293, %v278, 0
        %v319 = vsel %vm293, %v279, 0
        %v322 = vsel %vm293, %v280, 0
        %v325 = vsel %vm293, %v281, 0
        %v328 = vsel %vm293, %v282, 0
        %v331 = vsel %vm293, %v283, 0
        %v334 = vsel %vm293, %v284, 0
        %v337 = vsel %vm293, %v285, 0
        %v340 = vsel %vm293, %v286, 0
        %342 = vmatpush.bf16.msra.mxu0 0
        %343 = vmatpush.bf16.msra.mxu0 0
        %344 = vmatpush.bf16.msra.mxu0 0
        %345 = vmatpush.bf16.msra.mxu0 0
        %346 = vmatpush.bf16.msra.mxu0 0
        %347 = vmatpush.bf16.msra.mxu0 0
        %348 = vmatpush.bf16.msra.mxu0 0
        %349 = vmatpush.bf16.msra.mxu0 %v291
        %350 = vmatmul.bf16.gmra.mxu0 %v295
        %v351 = vpop.f32.mrf.mxu0
        %v352 = vadd.f32 %v205, %v351
        %v353 = vpop.f32.mrf.mxu0
        %v354 = vadd.f32 %v205, %v353
        %355 = vmatmul.bf16.gmra.mxu0 %v298
        %v356 = vpop.f32.mrf.mxu0
        %v357 = vadd.f32 %v205, %v356
        %v358 = vpop.f32.mrf.mxu0
        %v359 = vadd.f32 %v205, %v358
        %360 = vmatmul.bf16.gmra.mxu0 %v301
        %v361 = vpop.f32.mrf.mxu0
        %v362 = vadd.f32 %v205, %v361
        %v363 = vpop.f32.mrf.mxu0
        %v364 = vadd.f32 %v205, %v363
        %365 = vmatmul.bf16.gmra.mxu0 %v304
        %v366 = vpop.f32.mrf.mxu0
        %v367 = vadd.f32 %v205, %v366
        %v368 = vpop.f32.mrf.mxu0
        %v369 = vadd.f32 %v205, %v368
        %370 = vmatmul.bf16.gmra.mxu0 %v307
        %v371 = vpop.f32.mrf.mxu0
        %v372 = vadd.f32 %v205, %v371
        %v373 = vpop.f32.mrf.mxu0
        %v374 = vadd.f32 %v205, %v373
        %375 = vmatmul.bf16.gmra.mxu0 %v310
        %v376 = vpop.f32.mrf.mxu0
        %v377 = vadd.f32 %v205, %v376
        %v378 = vpop.f32.mrf.mxu0
        %v379 = vadd.f32 %v205, %v378
        %380 = vmatmul.bf16.gmra.mxu0 %v313
        %v381 = vpop.f32.mrf.mxu0
        %v382 = vadd.f32 %v205, %v381
        %v383 = vpop.f32.mrf.mxu0
        %v384 = vadd.f32 %v205, %v383
        %385 = vmatmul.bf16.gmra.mxu0 %v316
        %v386 = vpop.f32.mrf.mxu0
        %v387 = vadd.f32 %v205, %v386
        %v388 = vpop.f32.mrf.mxu0
        %v389 = vadd.f32 %v205, %v388
        %390 = vmatmul.bf16.gmra.mxu0 %v319
        %v391 = vpop.f32.mrf.mxu0
        %v392 = vadd.f32 %v205, %v391
        %v393 = vpop.f32.mrf.mxu0
        %v394 = vadd.f32 %v205, %v393
        %395 = vmatmul.bf16.gmra.mxu0 %v322
        %v396 = vpop.f32.mrf.mxu0
        %v397 = vadd.f32 %v205, %v396
        %v398 = vpop.f32.mrf.mxu0
        %v399 = vadd.f32 %v205, %v398
        %400 = vmatmul.bf16.gmra.mxu0 %v325
        %v401 = vpop.f32.mrf.mxu0
        %v402 = vadd.f32 %v205, %v401
        %v403 = vpop.f32.mrf.mxu0
        %v404 = vadd.f32 %v205, %v403
        %405 = vmatmul.bf16.gmra.mxu0 %v328
        %v406 = vpop.f32.mrf.mxu0
        %v407 = vadd.f32 %v205, %v406
        %v408 = vpop.f32.mrf.mxu0
        %v409 = vadd.f32 %v205, %v408
        %410 = vmatmul.bf16.gmra.mxu0 %v331
        %v411 = vpop.f32.mrf.mxu0
        %v412 = vadd.f32 %v205, %v411
        %v413 = vpop.f32.mrf.mxu0
        %v414 = vadd.f32 %v205, %v413
        %415 = vmatmul.bf16.gmra.mxu0 %v334
        %v416 = vpop.f32.mrf.mxu0
        %v417 = vadd.f32 %v205, %v416
        %v418 = vpop.f32.mrf.mxu0
        %v419 = vadd.f32 %v205, %v418
        %420 = vmatmul.bf16.gmra.mxu0 %v337
        %v421 = vpop.f32.mrf.mxu0
        %v422 = vadd.f32 %v205, %v421
        %v423 = vpop.f32.mrf.mxu0
        %v424 = vadd.f32 %v205, %v423
        %425 = vmatmul.bf16.gmra.mxu0 %v340
        %v426 = vpop.f32.mrf.mxu0
        %v427 = vadd.f32 %v205, %v426
        %v428 = vpop.f32.mrf.mxu0
        %v429 = vadd.f32 %v205, %v428
        %430 = vdwg.mxu0
        %v431 = vmax.f32 %v352, 0.0
        %v432 = vmax.f32 %v354, 0.0
        %v433 = vmax.f32 %v357, 0.0
        %v434 = vmax.f32 %v359, 0.0
        %v435 = vmax.f32 %v362, 0.0
        %v436 = vmax.f32 %v364, 0.0
        %v437 = vmax.f32 %v367, 0.0
        %v438 = vmax.f32 %v369, 0.0
        %v439 = vmax.f32 %v372, 0.0
        %v440 = vmax.f32 %v374, 0.0
        %v441 = vmax.f32 %v377, 0.0
        %v442 = vmax.f32 %v379, 0.0
        %v443 = vmax.f32 %v382, 0.0
        %v444 = vmax.f32 %v384, 0.0
        %v445 = vmax.f32 %v387, 0.0
        %v446 = vmax.f32 %v389, 0.0
        %v447 = vmax.f32 %v392, 0.0
        %v448 = vmax.f32 %v394, 0.0
        %v449 = vmax.f32 %v397, 0.0
        %v450 = vmax.f32 %v399, 0.0
        %v451 = vmax.f32 %v402, 0.0
        %v452 = vmax.f32 %v404, 0.0
        %v453 = vmax.f32 %v407, 0.0
        %v454 = vmax.f32 %v409, 0.0
        %v455 = vmax.f32 %v412, 0.0
        %v456 = vmax.f32 %v414, 0.0
        %v457 = vmax.f32 %v417, 0.0
        %v458 = vmax.f32 %v419, 0.0
        %v459 = vmax.f32 %v422, 0.0
        %v460 = vmax.f32 %v424, 0.0
        %v461 = vmax.f32 %v427, 0.0
        %v462 = vmax.f32 %v429, 0.0
        %vm463 = vcmask 261120
        %v464 = vsel %vm463, %v431, 0.0
        %v465 = vsel %vm463, %v432, 0.0
        %v466 = vadd.f32 %v464, %v465
        %v467 = vsel %vm463, %v433, 0.0
        %v468 = vadd.f32 %v466, %v467
        %v469 = vsel %vm463, %v434, 0.0
        %v470 = vadd.f32 %v468, %v469
        %v471 = vsel %vm463, %v435, 0.0
        %v472 = vadd.f32 %v470, %v471
        %v473 = vsel %vm463, %v436, 0.0
        %v474 = vadd.f32 %v472, %v473
        %v475 = vsel %vm463, %v437, 0.0
        %v476 = vadd.f32 %v474, %v475
        %v477 = vsel %vm463, %v438, 0.0
        %v478 = vadd.f32 %v476, %v477
        %v479 = vsel %vm463, %v439, 0.0
        %v480 = vadd.f32 %v478, %v479
        %v481 = vsel %vm463, %v440, 0.0
        %v482 = vadd.f32 %v480, %v481
        %v483 = vsel %vm463, %v441, 0.0
        %v484 = vadd.f32 %v482, %v483
        %v485 = vsel %vm463, %v442, 0.0
        %v486 = vadd.f32 %v484, %v485
        %v487 = vsel %vm463, %v443, 0.0
        %v488 = vadd.f32 %v486, %v487
        %v489 = vsel %vm463, %v444, 0.0
        %v490 = vadd.f32 %v488, %v489
        %v491 = vsel %vm463, %v445, 0.0
        %v492 = vadd.f32 %v490, %v491
        %v493 = vsel %vm463, %v446, 0.0
        %v494 = vadd.f32 %v492, %v493
        %v495 = vsel %vm463, %v447, 0.0
        %v496 = vadd.f32 %v494, %v495
        %v497 = vsel %vm463, %v448, 0.0
        %v498 = vadd.f32 %v496, %v497
        %v499 = vsel %vm463, %v449, 0.0
        %v500 = vadd.f32 %v498, %v499
        %v501 = vsel %vm463, %v450, 0.0
        %v502 = vadd.f32 %v500, %v501
        %v503 = vsel %vm463, %v451, 0.0
        %v504 = vadd.f32 %v502, %v503
        %v505 = vsel %vm463, %v452, 0.0
        %v506 = vadd.f32 %v504, %v505
        %v507 = vsel %vm463, %v453, 0.0
        %v508 = vadd.f32 %v506, %v507
        %v509 = vsel %vm463, %v454, 0.0
        %v510 = vadd.f32 %v508, %v509
        %v511 = vsel %vm463, %v455, 0.0
        %v512 = vadd.f32 %v510, %v511
        %v513 = vsel %vm463, %v456, 0.0
        %v514 = vadd.f32 %v512, %v513
        %v515 = vsel %vm463, %v457, 0.0
        %v516 = vadd.f32 %v514, %v515
        %v517 = vsel %vm463, %v458, 0.0
        %v518 = vadd.f32 %v516, %v517
        %v519 = vsel %vm463, %v459, 0.0
        %v520 = vadd.f32 %v518, %v519
        %v521 = vsel %vm463, %v460, 0.0
        %v522 = vadd.f32 %v520, %v521
        %v523 = vsel %vm463, %v461, 0.0
        %v524 = vadd.f32 %v522, %v523
        %v525 = vsel %vm463, %v462, 0.0
        %v526 = vadd.f32 %v524, %v525
        %v527 = vrot.slane %v526, 4
        %v528 = vadd.f32 %v526, %v527
        %v529 = vrot.slane %v528, 2
        %v530 = vadd.f32 %v528, %v529
        %v531 = vrot.slane %v530, 1
        %v532 = vadd.f32 %v530, %v531
        %v533 = vmul.f32 %v532, 0.00390625
        %vm534 = vcmask 253952
        %535 = vst.msk [vmem:[%s162] sm:$0x1] %vm534, %v533
        %s536 = sand.u32 %s93, 1
        %s537 = scalar_lea.sflag [#allocation3], %s536
        %s538 = sand.u32 %s93, 1
        %s539 = scalar_lea.vmem [#allocation2], %s538
        // Predicated region
        $region33: #{tpu_custom_call.1} parent=31 // pred_check
          %p540 = pneg %p103
        $region34: #{tpu_custom_call.1} parent=31 // pred_check_branch
          %542 = sbr.rel (%p540) target = $region36
        $region35: #{tpu_custom_call.1} parent=31 // pred_region
          %544 = vsyncadd %s537, 0
          %s545 = scalar_lea.hbm %s3, %s17
          %s547 = sshll.u32 %s539, 4
          %s548 = int_to_ptr.vmem [resolvable:$true] %s547
          %s549 = sshll.u32 %s545, 4
          %s550 = int_to_ptr.hbm [resolvable:$true] %s549
          %552 = dma.vmem_to_hbm [thread:$0]  %s548, 16, %s550, %s537
        $region36: #{tpu_custom_call.1} parent=31 // pred_fallthru
          _
      $region32: #{tpu_custom_call.1} parent=5 // pred_fallthru
        _
      %p553 = scmp.le.s32.totalorder 2, %s12
      // Predicated region
      $region37: #{tpu_custom_call.1} parent=5 // pred_check
        %p554 = pneg %p553
      $region38: #{tpu_custom_call.1} parent=5 // pred_check_branch
        %556 = sbr.rel (%p554) target = $region40
      $region39: #{tpu_custom_call.1} parent=5 // pred_region
        %s557 = ssub.s32 %s12, 2
        // Predicated region
        $region41: #{tpu_custom_call.1} parent=39 // pred_check
          %p558 = pneg %p109
        $region42: #{tpu_custom_call.1} parent=39 // pred_check_branch
          %560 = sbr.rel (%p558) target = $region44
        $region43: #{tpu_custom_call.1} parent=39 // pred_region
          %s561 = sand.u32 %s94, 1
          %s562 = scalar_lea.sflag [#allocation3], %s561
          %s563 = sand.u32 %s94, 1
          %s564 = scalar_lea.vmem [#allocation2], %s563
          %566 = dma.done %s562, 16
        $region44: #{tpu_custom_call.1} parent=39 // pred_fallthru
          _
      $region40: #{tpu_custom_call.1} parent=5 // pred_fallthru
        _
    $region6: #{tpu_custom_call.1} parent=1 // loop_footer
      %s16 = sadd.s32 1, %s12
    $region7: #{tpu_custom_call.1} parent=1 // loop_footer_branch
      %11 = sbr.rel target = $region3
    $region8: #{tpu_custom_call.1} parent=1 // loop_exit
      _
    %567 = vsyncpa [#allocation3], 1
    %s568 = scalar_lea.sflag [#allocation3], 1
    %569 = vsyncpa %s568, 1

</llo_original>
